<compile_context>
chip_gen: v6e
topology: v6e:2x2x1
jax: 0.10.0
libtpu: 0.0.40
codegen_flags: <defaults>
</compile_context>

<pallas_src>
import jax
import jax.numpy as jnp
from jax import lax
from jax.experimental import pallas as pl
from jax.experimental.pallas import tpu as pltpu


def _round_up(x, m):
    return (x + m - 1) // m * m


def _make_fire_dec_kernel(wp):
    """wp = padded row width; 3x3 tap (ky, kx) starts at flat lane ky*wp + kx."""

    def kernel(xpf_ref, wct_ref, be_ref, wst_ref, bs_ref, out_ref):
        # xpf_ref: (1, C, Hp*wp)  bf16 zero-padded image, spatial dims flattened
        # wct_ref: (2E, 9C)       combined expand weight (1x1 folded into the
        #                         centre-tap rows of the first E channels), T
        # be_ref : (2E, 1)        concat([b1, b3])
        # wst_ref: (S, 2E)        squeeze weight, transposed
        # bs_ref : (S, 1)         squeeze bias
        # out_ref: (1, S, H*wp)   lane-dense output (junk cols w >= W dropped by caller)
        m = out_ref.shape[2]                       # H * wp (multiple of 128)
        xp = xpf_ref[0].astype(jnp.float32)        # (C, Hp*wp), upcast once

        # im2col, transposed: every 3x3 tap is a contiguous lane window of the
        # flattened padded image -> build the (9C, H*wp) patch matrix once.
        pieces = [xp[:, ky * wp + kx: ky * wp + kx + m]
                  for ky in range(3) for kx in range(3)]
        patches = jnp.concatenate(pieces, axis=0)  # (9C, H*wp)

        # expand1x1 + expand3x3 + channel concat fused into ONE MXU push.
        ex = jnp.dot(wct_ref[...], patches, preferred_element_type=jnp.float32)
        ex = jnp.maximum(ex + be_ref[...], 0.0)    # (2E, H*wp), single ReLU

        # squeeze 1x1 on the concatenated channels: ONE more MXU push.
        o = jnp.dot(wst_ref[...], ex, preferred_element_type=jnp.float32)
        o = jnp.maximum(o + bs_ref[...], 0.0)      # (S, H*wp), lane-dense store
        out_ref[0] = o.astype(out_ref.dtype)

    return kernel


def fire_dec_pallas(x_nchw, w1, b1, w3, b3, ws, bs):
    """x_nchw: (N, C_in, H, W).  Parameters:
       w1 (C_in, E), w3 (3, 3, C_in, E), ws (2E, S); biases b1/b3 (E,), bs (S,).
       Returns (N, S, H, W) float32."""
    N, C, H, W = x_nchw.shape
    E = w1.shape[1]
    S = ws.shape[1]

    # Padded row width: >= W+2 (halo), rounded so H*Wp is a multiple of 128
    # (lane-dense output).  Hp = H+3 keeps every tap window in bounds; the extra
    # columns produce junk outputs that are sliced off for free afterwards.
    Wp = _round_up(W + 2, 8)
    while (H * Wp) % 128 != 0 and Wp < W + 2 + 128:
        Wp += 8
    Hp = H + 3
    M = H * Wp                      # kernel output minor dim
    Lp = Hp * Wp                    # kernel input minor dim

    # bf16 input in HBM (halves DMA bytes); pad halo and flatten spatial dims.
    xpad = jnp.pad(x_nchw.astype(jnp.bfloat16),
                   ((0, 0), (0, 0), (1, Hp - H - 1), (1, Wp - W - 1)))
    xpf = xpad.reshape(N, C, Lp)    # contiguous reshape: no data movement

    # Combined expand weight: columns [:E] hold the 1x1 conv (centre tap rows
    # only), columns [E:] hold the 3x3 conv, so one matmul realises both
    # branches AND the channel concat.  Passed transposed: (2E, 9C).
    wc = jnp.zeros((9 * C, 2 * E), jnp.float32)
    wc = wc.at[4 * C:5 * C, :E].set(w1.astype(jnp.float32))      # centre tap (1,1)
    wc = wc.at[:, E:].set(w3.reshape(9 * C, E).astype(jnp.float32))
    wct = wc.T                                                    # (2E, 9C)
    wst = ws.T.astype(jnp.float32)                                # (S, 2E)
    be = jnp.concatenate([b1, b3]).reshape(2 * E, 1).astype(jnp.float32)
    bs2 = bs.reshape(S, 1).astype(jnp.float32)

    out_flat = pl.pallas_call(
        _make_fire_dec_kernel(Wp),
        out_shape=jax.ShapeDtypeStruct((N, S, M), jnp.float32),
        grid_spec=pltpu.PrefetchScalarGridSpec(
            num_scalar_prefetch=0,
            grid=(N,),
            in_specs=[
                pl.BlockSpec((1, C, Lp), lambda n: (n, 0, 0)),
                pl.BlockSpec((2 * E, 9 * C), lambda n: (0, 0)),
                pl.BlockSpec((2 * E, 1), lambda n: (0, 0)),
                pl.BlockSpec((S, 2 * E), lambda n: (0, 0)),
                pl.BlockSpec((S, 1), lambda n: (0, 0)),
            ],
            out_specs=pl.BlockSpec((1, S, M), lambda n: (n, 0, 0)),
        ),
        compiler_params=pltpu.CompilerParams(
            dimension_semantics=("parallel",)),   # batch images -> v7x cores
    )(xpf, wct, be, wst, bs2)

    # (N, S, H*Wp) -> (N, S, H, W): free reshape + tiny slice (no transpose).
    return out_flat.reshape(N, S, H, Wp)[:, :, :, :W]


def fire_dec_reference(x_nchw, w1, b1, w3, b3, ws, bs):
    """Pure-JAX reference matching the PyTorch forward (NCHW conv semantics)."""
    dn = ("NCHW", "OIHW", "NCHW")
    hp = lax.Precision.HIGHEST
    w1_oihw = jnp.transpose(w1)[:, :, None, None]                # (E, C, 1, 1)
    w3_oihw = jnp.transpose(w3, (3, 2, 0, 1))                    # (E, C, 3, 3)
    ws_oihw = jnp.transpose(ws)[:, :, None, None]                # (S, 2E, 1, 1)

    y = lax.conv_general_dilated(x_nchw, w1_oihw, (1, 1), "VALID",
                                 dimension_numbers=dn, precision=hp)
    y = jnp.maximum(y + b1[None, :, None, None], 0.0)
    z = lax.conv_general_dilated(x_nchw, w3_oihw, (1, 1),
                                 ((1, 1), (1, 1)), dimension_numbers=dn,
                                 precision=hp)
    z = jnp.maximum(z + b3[None, :, None, None], 0.0)
    cat = jnp.concatenate([y, z], axis=1)
    o = lax.conv_general_dilated(cat, ws_oihw, (1, 1), "VALID",
                                 dimension_numbers=dn, precision=hp)
    return jnp.maximum(o + bs[None, :, None, None], 0.0)


if __name__ == "__main__":
    # fireDec(input_size=4, squeeze_dim=4, expand_dim=8)
    N, C_in, H, W = 2, 4, 16, 16
    E, S = 8, 4

    key = jax.random.PRNGKey(0)
    ks = jax.random.split(key, 8)
    x = jax.random.normal(ks[0], (N, C_in, H, W), jnp.float32)

    # deterministic synthetic parameter init (shapes match nn.Conv2d params)
    w1 = 0.2 * jax.random.normal(ks[1], (C_in, E), jnp.float32)
    b1 = 0.1 * jax.random.normal(ks[2], (E,), jnp.float32)
    w3 = 0.1 * jax.random.normal(ks[3], (3, 3, C_in, E), jnp.float32)
    b3 = 0.1 * jax.random.normal(ks[4], (E,), jnp.float32)
    ws = 0.2 * jax.random.normal(ks[5], (2 * E, S), jnp.float32)
    bs = 0.1 * jax.random.normal(ks[6], (S,), jnp.float32)

    out = fire_dec_pallas(x, w1, b1, w3, b3, ws, bs)
    out = jax.block_until_ready(out)

    # Reference uses the same bf16-quantized input the kernel consumes (the
    # kernel stores x in HBM as bf16 by design); f32 everywhere else.
    xq = x.astype(jnp.bfloat16).astype(jnp.float32)
    ref = fire_dec_reference(xq, w1, b1, w3, b3, ws, bs)

    assert out.shape == (N, S, H, W), out.shape
    assert jnp.allclose(out, ref, atol=2e-2, rtol=2e-2), float(
        jnp.max(jnp.abs(out - ref)))

    print("KERNEL_OK")
</pallas_src>

<mosaic_0001>
module attributes {stable_mosaic.version = 11 : i64} {
  func.func @kernel(%arg0: i32, %arg1: memref<1x4x456xbf16, #tpu.memory_space<vmem>>, %arg2: memref<16x36xf32, #tpu.memory_space<vmem>>, %arg3: memref<16x1xf32, #tpu.memory_space<vmem>>, %arg4: memref<4x16xf32, #tpu.memory_space<vmem>>, %arg5: memref<4x1xf32, #tpu.memory_space<vmem>>, %arg6: memref<1x4x384xf32, #tpu.memory_space<vmem>>) attributes {dimension_semantics = [#tpu.dimension_semantics<parallel>], iteration_bounds = array<i64: 2>, scalar_prefetch = 0 : i64, scratch_operands = 0 : i64, tpu.core_type = #tpu.core_type<tc>, window_params = [{transform_indices = @transform_0, window_bounds = array<i64: 1, 4, 456>}, {pipeline_mode = #tpu.pipeline_mode<synchronous>, transform_indices = @transform_1, window_bounds = array<i64: 16, 36>}, {pipeline_mode = #tpu.pipeline_mode<synchronous>, transform_indices = @transform_2, window_bounds = array<i64: 16, 1>}, {pipeline_mode = #tpu.pipeline_mode<synchronous>, transform_indices = @transform_3, window_bounds = array<i64: 4, 16>}, {pipeline_mode = #tpu.pipeline_mode<synchronous>, transform_indices = @transform_4, window_bounds = array<i64: 4, 1>}, {transform_indices = @transform_5, window_bounds = array<i64: 1, 4, 384>}]} {
    %c0 = arith.constant 0 : index
    %c0_0 = arith.constant 0 : index
    %c0_1 = arith.constant 0 : index
    %0 = vector.load %arg1[%c0, %c0_0, %c0_1] : memref<1x4x456xbf16, #tpu.memory_space<vmem>>, vector<1x4x456xbf16>
    %1 = vector.shape_cast %0 : vector<1x4x456xbf16> to vector<4x456xbf16>
    %2 = arith.extf %1 : vector<4x456xbf16> to vector<4x456xf32>
    %3 = vector.extract_strided_slice %2 {offsets = [0, 0], sizes = [4, 384], strides = [1, 1]} : vector<4x456xf32> to vector<4x384xf32>
    %4 = vector.extract_strided_slice %2 {offsets = [0, 1], sizes = [4, 384], strides = [1, 1]} : vector<4x456xf32> to vector<4x384xf32>
    %5 = vector.extract_strided_slice %2 {offsets = [0, 2], sizes = [4, 384], strides = [1, 1]} : vector<4x456xf32> to vector<4x384xf32>
    %6 = vector.extract_strided_slice %2 {offsets = [0, 24], sizes = [4, 384], strides = [1, 1]} : vector<4x456xf32> to vector<4x384xf32>
    %7 = vector.extract_strided_slice %2 {offsets = [0, 25], sizes = [4, 384], strides = [1, 1]} : vector<4x456xf32> to vector<4x384xf32>
    %8 = vector.extract_strided_slice %2 {offsets = [0, 26], sizes = [4, 384], strides = [1, 1]} : vector<4x456xf32> to vector<4x384xf32>
    %9 = vector.extract_strided_slice %2 {offsets = [0, 48], sizes = [4, 384], strides = [1, 1]} : vector<4x456xf32> to vector<4x384xf32>
    %10 = vector.extract_strided_slice %2 {offsets = [0, 49], sizes = [4, 384], strides = [1, 1]} : vector<4x456xf32> to vector<4x384xf32>
    %11 = vector.extract_strided_slice %2 {offsets = [0, 50], sizes = [4, 384], strides = [1, 1]} : vector<4x456xf32> to vector<4x384xf32>
    %12 = tpu.concatenate %3, %4, %5, %6, %7, %8, %9, %10, %11 in 0 : vector<4x384xf32>, vector<4x384xf32>, vector<4x384xf32>, vector<4x384xf32>, vector<4x384xf32>, vector<4x384xf32>, vector<4x384xf32>, vector<4x384xf32>, vector<4x384xf32> -> vector<36x384xf32>
    %c0_2 = arith.constant 0 : index
    %c0_3 = arith.constant 0 : index
    %13 = vector.load %arg2[%c0_2, %c0_3] : memref<16x36xf32, #tpu.memory_space<vmem>>, vector<16x36xf32>
    %cst = arith.constant dense<0.000000e+00> : vector<16x384xf32>
    %14 = tpu.matmul %13, %12, %cst {dimension_numbers = #tpu.dot_dimension_numbers<[1], [0], [0], [1], [0, 0, 1, 1], [], []>} : vector<16x36xf32>, vector<36x384xf32>, vector<16x384xf32> -> vector<16x384xf32>
    %c0_4 = arith.constant 0 : index
    %c0_5 = arith.constant 0 : index
    %15 = vector.load %arg3[%c0_4, %c0_5] : memref<16x1xf32, #tpu.memory_space<vmem>>, vector<16x1xf32>
    %16 = vector.broadcast %15 : vector<16x1xf32> to vector<16x384xf32>
    %17 = arith.addf %14, %16 : vector<16x384xf32>
    %cst_6 = arith.constant 0.000000e+00 : f32
    %18 = vector.broadcast %cst_6 : f32 to vector<16x384xf32>
    %19 = arith.maximumf %17, %18 : vector<16x384xf32>
    %c0_7 = arith.constant 0 : index
    %c0_8 = arith.constant 0 : index
    %20 = vector.load %arg4[%c0_7, %c0_8] : memref<4x16xf32, #tpu.memory_space<vmem>>, vector<4x16xf32>
    %cst_9 = arith.constant dense<0.000000e+00> : vector<4x384xf32>
    %21 = tpu.matmul %20, %19, %cst_9 {dimension_numbers = #tpu.dot_dimension_numbers<[1], [0], [0], [1], [0, 0, 1, 1], [], []>} : vector<4x16xf32>, vector<16x384xf32>, vector<4x384xf32> -> vector<4x384xf32>
    %c0_10 = arith.constant 0 : index
    %c0_11 = arith.constant 0 : index
    %22 = vector.load %arg5[%c0_10, %c0_11] : memref<4x1xf32, #tpu.memory_space<vmem>>, vector<4x1xf32>
    %23 = vector.broadcast %22 : vector<4x1xf32> to vector<4x384xf32>
    %24 = arith.addf %21, %23 : vector<4x384xf32>
    %cst_12 = arith.constant 0.000000e+00 : f32
    %25 = vector.broadcast %cst_12 : f32 to vector<4x384xf32>
    %26 = arith.maximumf %24, %25 : vector<4x384xf32>
    %c0_13 = arith.constant 0 : index
    %c0_14 = arith.constant 0 : index
    %c0_15 = arith.constant 0 : index
    %27 = vector.load %arg6[%c0_13, %c0_14, %c0_15] : memref<1x4x384xf32, #tpu.memory_space<vmem>>, vector<1x4x384xf32>
    %28 = vector.shape_cast %27 : vector<1x4x384xf32> to vector<4x384xf32>
    %29 = vector.shape_cast %26 : vector<4x384xf32> to vector<1x4x384xf32>
    tpu.vector_store %arg6[%c0_13, %c0_14, %c0_15], %29 {strides = array<i32>} : memref<1x4x384xf32, #tpu.memory_space<vmem>>, vector<1x4x384xf32>,
    return
  }
  func.func @transform_0(%arg0: i32) -> (i32, i32, i32) {
    %c0_i32 = arith.constant 0 : i32
    %c0_i32_0 = arith.constant 0 : i32
    %c0_i32_1 = arith.constant 0 : i32
    return %arg0, %c0_i32, %c0_i32_0 : i32, i32, i32
  }
  func.func @transform_1(%arg0: i32) -> (i32, i32) {
    %c0_i32 = arith.constant 0 : i32
    %c0_i32_0 = arith.constant 0 : i32
    %c0_i32_1 = arith.constant 0 : i32
    return %c0_i32, %c0_i32_0 : i32, i32
  }
  func.func @transform_2(%arg0: i32) -> (i32, i32) {
    %c0_i32 = arith.constant 0 : i32
    %c0_i32_0 = arith.constant 0 : i32
    %c0_i32_1 = arith.constant 0 : i32
    return %c0_i32, %c0_i32_0 : i32, i32
  }
  func.func @transform_3(%arg0: i32) -> (i32, i32) {
    %c0_i32 = arith.constant 0 : i32
    %c0_i32_0 = arith.constant 0 : i32
    %c0_i32_1 = arith.constant 0 : i32
    return %c0_i32, %c0_i32_0 : i32, i32
  }
  func.func @transform_4(%arg0: i32) -> (i32, i32) {
    %c0_i32 = arith.constant 0 : i32
    %c0_i32_0 = arith.constant 0 : i32
    %c0_i32_1 = arith.constant 0 : i32
    return %c0_i32, %c0_i32_0 : i32, i32
  }
  func.func @transform_5(%arg0: i32) -> (i32, i32, i32) {
    %c0_i32 = arith.constant 0 : i32
    %c0_i32_0 = arith.constant 0 : i32
    %c0_i32_1 = arith.constant 0 : i32
    return %arg0, %c0_i32, %c0_i32_0 : i32, i32, i32
  }
}

</mosaic_0001>

<llo_original>
// kernel: tpu_custom_call.1
$region0: #{tpu_custom_call.1}
  #allocation0 [shape = 'u32[]', space=smem, size = 0x4, offset = 0x4, fixed_abs, tag = 'smem constant byte address 0x4 - core index']
  #allocation1 [shape = 'u32[144,128]{1,0:T(1,128)}', space=vmem, size = 0x12000, scoped, tag = 'internal scratch']
  %s0 = inlined_call_operand.vmem [shape: bf16[2,4,456], index: 0, kind: input, shape index: {}]
  %s1 = inlined_call_operand.hbm [shape: f32[16,36], index: 1, kind: input, shape index: {}]
  %s2 = inlined_call_operand.vmem [shape: f32[16,1], index: 2, kind: input, shape index: {}]
  %s3 = inlined_call_operand.vmem [shape: f32[4,16], index: 3, kind: input, shape index: {}]
  %s4 = inlined_call_operand.vmem [shape: f32[4,1], index: 4, kind: input, shape index: {}]
  %s5 = inlined_call_operand.hbm [shape: f32[2,4,384], index: 5, kind: output, shape index: {}]
  %s6 = sld [smem:[#allocation0]]
  $region57: #{tpu_custom_call.1} parent=0
    _
  %s8 = ssub.s32 1, %s6
  %s9 = scalar_select 0, %s8, %s6
  $region1: #{tpu_custom_call.1} parent=0
    #allocation2 [shape = 'u8[8192]{0}', space=vmem, size = 0x2000, scoped, tag = 'input window, operand 1, single buffered']
    #allocation3 [shape = 's32[2]{0}', space=sflag, size = 0x8, scoped, tag = 'scoped memory for tpu_custom_call.1']
    #allocation4 [shape = 's32[2]{0}', space=sflag, size = 0x8, scoped, tag = 'scoped memory for tpu_custom_call.1']
    #allocation5 [shape = 'u8[12288]{0}', space=vmem, size = 0x3000, scoped, tag = 'output window, operand 0']
    %10 = vsyncpa [#allocation3], 0
    %11 = vsyncpa [#allocation4], 0
    %s12 = scalar_lea.sflag [#allocation4], 1
    %13 = vsyncpa %s12, 0
    loop: start=0, step=1, limit=4
    $region2: #{tpu_custom_call.1} parent=1 // loop_pre_header
      _
    $region3: #{tpu_custom_call.1} parent=1 // loop_header
      %s15 = sphi 0, %s19
      %p16 = scmp.ge.s32.totalorder %s15, 4
      %s25 = sphi 0, %s27
      %s28 = sphi 0, %s25
      %s29 = sphi 0, %s28
      %s45 = sphi 0, %s29
      %s49 = sphi 0, %s49
      %s51 = sphi 0, %s49
      %s52 = sphi 0, %s51
      %s66 = sphi 0, %s52
      %s70 = sphi 0, %s70
      %s72 = sphi 0, %s70
      %s73 = sphi 0, %s72
      %s87 = sphi 0, %s73
      %s91 = sphi 0, %s91
      %s93 = sphi 0, %s91
      %s94 = sphi 0, %s93
      %s108 = sphi 0, %s94
      %s112 = sphi 0, %s112
      %s114 = sphi 0, %s112
      %s115 = sphi 0, %s114
      %s129 = sphi 0, %s115
      %s135 = sphi 0, %s137
      %s138 = sphi 0, %s135
      %s139 = sphi 0, %s138
      %s155 = sphi 0, %s139
    $region4: #{tpu_custom_call.1} parent=1 // loop_header_branch
      %18 = sbr.rel (%p16) target = $region8
    $region5: #{tpu_custom_call.1} parent=1 // loop_body
      %s20 = ssub.s32 %s15, 1
      %s21 = ssub.s32 %s15, 2
      %s22 = sadd.s32 %s15, 1
      %s23 = ssub.s32 %s15, %s22
      %p24 = scmp.eq.s32.totalorder %s23, 0
      %s26 = sadd.s32 %s25, 1
      %s27 = scalar_select %p24, %s25, %s26
      %p30 = pneg %p24
      %p31 = scmp.eq.s32.totalorder %s15, 1
      %p32 = por %p30, %p31
      %p33 = scmp.ne.s32.totalorder %s25, %s28
      %p34 = scmp.eq.s32.totalorder %s15, 0
      %p35 = por %p33, %p34
      %p36 = scmp.ne.s32.totalorder %s25, %s28
      %p37 = scmp.eq.s32.totalorder %s20, 1
      %p38 = por %p36, %p37
      %p39 = scmp.ne.s32.totalorder %s28, %s29
      %p40 = scmp.eq.s32.totalorder %s20, 0
      %p41 = por %p39, %p40
      %p42 = scmp.ne.s32.totalorder %s28, %s29
      %p43 = scmp.eq.s32.totalorder %s21, 1
      %p44 = por %p42, %p43
      %p46 = scmp.ne.s32.totalorder %s29, %s45
      %p47 = scmp.eq.s32.totalorder %s21, 0
      %p48 = por %p46, %p47
      %s50 = sadd.s32 %s49, 1
      %p53 = scmp.eq.s32.totalorder %s15, 1
      %p54 = scmp.ne.s32.totalorder %s49, %s51
      %p55 = scmp.eq.s32.totalorder %s15, 0
      %p56 = por %p54, %p55
      %p57 = scmp.ne.s32.totalorder %s49, %s51
      %p58 = scmp.eq.s32.totalorder %s20, 1
      %p59 = por %p57, %p58
      %p60 = scmp.ne.s32.totalorder %s51, %s52
      %p61 = scmp.eq.s32.totalorder %s20, 0
      %p62 = por %p60, %p61
      %p63 = scmp.ne.s32.totalorder %s51, %s52
      %p64 = scmp.eq.s32.totalorder %s21, 1
      %p65 = por %p63, %p64
      %p67 = scmp.ne.s32.totalorder %s52, %s66
      %p68 = scmp.eq.s32.totalorder %s21, 0
      %p69 = por %p67, %p68
      %s71 = sadd.s32 %s70, 1
      %p74 = scmp.eq.s32.totalorder %s15, 1
      %p75 = scmp.ne.s32.totalorder %s70, %s72
      %p76 = scmp.eq.s32.totalorder %s15, 0
      %p77 = por %p75, %p76
      %p78 = scmp.ne.s32.totalorder %s70, %s72
      %p79 = scmp.eq.s32.totalorder %s20, 1
      %p80 = por %p78, %p79
      %p81 = scmp.ne.s32.totalorder %s72, %s73
      %p82 = scmp.eq.s32.totalorder %s20, 0
      %p83 = por %p81, %p82
      %p84 = scmp.ne.s32.totalorder %s72, %s73
      %p85 = scmp.eq.s32.totalorder %s21, 1
      %p86 = por %p84, %p85
      %p88 = scmp.ne.s32.totalorder %s73, %s87
      %p89 = scmp.eq.s32.totalorder %s21, 0
      %p90 = por %p88, %p89
      %s92 = sadd.s32 %s91, 1
      %p95 = scmp.eq.s32.totalorder %s15, 1
      %p96 = scmp.ne.s32.totalorder %s91, %s93
      %p97 = scmp.eq.s32.totalorder %s15, 0
      %p98 = por %p96, %p97
      %p99 = scmp.ne.s32.totalorder %s91, %s93
      %p100 = scmp.eq.s32.totalorder %s20, 1
      %p101 = por %p99, %p100
      %p102 = scmp.ne.s32.totalorder %s93, %s94
      %p103 = scmp.eq.s32.totalorder %s20, 0
      %p104 = por %p102, %p103
      %p105 = scmp.ne.s32.totalorder %s93, %s94
      %p106 = scmp.eq.s32.totalorder %s21, 1
      %p107 = por %p105, %p106
      %p109 = scmp.ne.s32.totalorder %s94, %s108
      %p110 = scmp.eq.s32.totalorder %s21, 0
      %p111 = por %p109, %p110
      %s113 = sadd.s32 %s112, 1
      %p116 = scmp.eq.s32.totalorder %s15, 1
      %p117 = scmp.ne.s32.totalorder %s112, %s114
      %p118 = scmp.eq.s32.totalorder %s15, 0
      %p119 = por %p117, %p118
      %p120 = scmp.ne.s32.totalorder %s112, %s114
      %p121 = scmp.eq.s32.totalorder %s20, 1
      %p122 = por %p120, %p121
      %p123 = scmp.ne.s32.totalorder %s114, %s115
      %p124 = scmp.eq.s32.totalorder %s20, 0
      %p125 = por %p123, %p124
      %p126 = scmp.ne.s32.totalorder %s114, %s115
      %p127 = scmp.eq.s32.totalorder %s21, 1
      %p128 = por %p126, %p127
      %p130 = scmp.ne.s32.totalorder %s115, %s129
      %p131 = scmp.eq.s32.totalorder %s21, 0
      %p132 = por %p130, %p131
      %s133 = ssub.s32 %s15, %s22
      %p134 = scmp.eq.s32.totalorder %s133, 0
      %s136 = sadd.s32 %s135, 1
      %s137 = scalar_select %p134, %s135, %s136
      %p140 = pneg %p134
      %p141 = scmp.eq.s32.totalorder %s15, 1
      %p142 = por %p140, %p141
      %p143 = scmp.ne.s32.totalorder %s135, %s138
      %p144 = scmp.eq.s32.totalorder %s15, 0
      %p145 = por %p143, %p144
      %p146 = scmp.ne.s32.totalorder %s135, %s138
      %p147 = scmp.eq.s32.totalorder %s20, 1
      %p148 = por %p146, %p147
      %p149 = scmp.ne.s32.totalorder %s138, %s139
      %p150 = scmp.eq.s32.totalorder %s20, 0
      %p151 = por %p149, %p150
      %p152 = scmp.ne.s32.totalorder %s138, %s139
      %p153 = scmp.eq.s32.totalorder %s21, 1
      %p154 = por %p152, %p153
      %p156 = scmp.ne.s32.totalorder %s139, %s155
      %p157 = scmp.eq.s32.totalorder %s21, 0
      %p158 = por %p156, %p157
      %p159 = scmp.le.s32.totalorder 1, %s15
      %p160 = scmp.lt.s32.totalorder %s15, 3
      %p161 = pnand %p159, %p160
      %p162 = pneg %p161
      // Predicated region
      $region9: #{tpu_custom_call.1} parent=5 // pred_check
        _
      $region10: #{tpu_custom_call.1} parent=5 // pred_check_branch
        %164 = sbr.rel (%p161) target = $region12
      $region11: #{tpu_custom_call.1} parent=5 // pred_region
        %s165 = ssub.s32 %s15, 1
        // Predicated region
        $region13: #{tpu_custom_call.1} parent=11 // pred_check
          %p166 = pneg %p62
        $region14: #{tpu_custom_call.1} parent=11 // pred_check_branch
          %168 = sbr.rel (%p166) target = $region16
        $region15: #{tpu_custom_call.1} parent=11 // pred_region
          %s170 = ssub.s32 256, 256
          %171 = vsyncadd [#allocation3], %s170
          %s172 = sshll.u32 [#allocation2], 4
          %s173 = int_to_ptr.vmem [resolvable:$true] %s172
          %178 = dma.hbm_to_vmem [thread:$0]  %s1, 256, %s173, [#allocation3], 128, 128, 8
        $region16: #{tpu_custom_call.1} parent=11 // pred_fallthru
          _
        // Predicated region
        $region17: #{tpu_custom_call.1} parent=11 // pred_check
          %p179 = pneg %p83
        $region18: #{tpu_custom_call.1} parent=11 // pred_check_branch
          %181 = sbr.rel (%p179) target = $region20
        $region19: #{tpu_custom_call.1} parent=11 // pred_region
          _
        $region20: #{tpu_custom_call.1} parent=11 // pred_fallthru
          _
        // Predicated region
        $region21: #{tpu_custom_call.1} parent=11 // pred_check
          %p182 = pneg %p104
        $region22: #{tpu_custom_call.1} parent=11 // pred_check_branch
          %184 = sbr.rel (%p182) target = $region24
        $region23: #{tpu_custom_call.1} parent=11 // pred_region
          _
        $region24: #{tpu_custom_call.1} parent=11 // pred_fallthru
          _
        // Predicated region
        $region25: #{tpu_custom_call.1} parent=11 // pred_check
          %p185 = pneg %p125
        $region26: #{tpu_custom_call.1} parent=11 // pred_check_branch
          %187 = sbr.rel (%p185) target = $region28
        $region27: #{tpu_custom_call.1} parent=11 // pred_region
          _
        $region28: #{tpu_custom_call.1} parent=11 // pred_fallthru
          _
      $region12: #{tpu_custom_call.1} parent=5 // pred_fallthru
        _
      %p188 = scmp.lt.s32.totalorder %s15, 2
      // Predicated region
      $region29: #{tpu_custom_call.1} parent=5 // pred_check
        %p189 = pneg %p188
      $region30: #{tpu_custom_call.1} parent=5 // pred_check_branch
        %191 = sbr.rel (%p189) target = $region32
      $region31: #{tpu_custom_call.1} parent=5 // pred_region
        // Predicated region
        $region33: #{tpu_custom_call.1} parent=31 // pred_check
          %p192 = pneg %p35
        $region34: #{tpu_custom_call.1} parent=31 // pred_check_branch
          %194 = sbr.rel (%p192) target = $region36
        $region35: #{tpu_custom_call.1} parent=31 // pred_region
          %p195 = scmp.lt.s32.totalorder %s15, 1
          %s196 = scalar_select %p195, %s15, 1
          %s197 = smul.addr %s196, 4
          %s198 = smul.addr %s197, 2
          %s199 = scalar_lea.vmem %s0, %s198
        $region36: #{tpu_custom_call.1} parent=31 // pred_fallthru
          _
      $region32: #{tpu_custom_call.1} parent=5 // pred_fallthru
        _
      %p200 = scmp.le.s32.totalorder 1, %s15
      %p201 = scmp.lt.s32.totalorder %s15, 3
      %p202 = pnand %p200, %p201
      %p203 = pneg %p202
      // Predicated region
      $region37: #{tpu_custom_call.1} parent=5 // pred_check
        _
      $region38: #{tpu_custom_call.1} parent=5 // pred_check_branch
        %205 = sbr.rel (%p202) target = $region40
      $region39: #{tpu_custom_call.1} parent=5 // pred_region
        %s206 = ssub.s32 %s15, 1
        // Predicated region
        $region41: #{tpu_custom_call.1} parent=39 // pred_check
          %p207 = pneg %p62
        $region42: #{tpu_custom_call.1} parent=39 // pred_check_branch
          %209 = sbr.rel (%p207) target = $region44
        $region43: #{tpu_custom_call.1} parent=39 // pred_region
          %210 = dma.done [#allocation3], 256
        $region44: #{tpu_custom_call.1} parent=39 // pred_fallthru
          _
        %p211 = scmp.lt.s32.totalorder %s20, 1
        %s212 = scalar_select %p211, %s20, 1
        %s213 = smul.addr %s212, 4
        %s214 = smul.addr %s213, 2
        %s215 = scalar_lea.vmem %s0, %s214
        %p216 = pneg %p41
        %p217 = pneg %p38
        %p218 = pneg %p62
        %p219 = pneg %p59
        %p220 = pneg %p83
        %p221 = pneg %p80
        %p222 = pneg %p104
        %p223 = pneg %p101
        %p224 = pneg %p125
        %p225 = pneg %p122
        %p226 = pneg %p151
        %p227 = pneg %p148
        %s228 = sand.u32 %s138, 1
        %s229 = scalar_lea.sflag [#allocation4], %s228
        %s230 = sand.u32 %s138, 1
        %s231 = smul.addr %s230, 12
        %s232 = scalar_lea.vmem [#allocation5], %s231
        %p233 = scmp.lt.s32.totalorder %s20, 1
        %s234 = scalar_select %p233, %s20, 1
        %s235 = smul.addr %s234, 4
        %s236 = smul.addr %s235, 2
        %s237 = scalar_lea.vmem %s0, %s236
        %v238 = vld [vmem:[%s237] sm:$0xff]
        %v239 = vunpack.c.l.bf16 %v238
        %v240 = vunpack.c.h.bf16 %v238
        %v243 = vcombine.high %v239, %v239
        %v245 = vcombine.low %v239, %v239
        %v246 = vcombine.low %v240, %v240
        %247 = vrot.lane.b32.xlu0 %v245, 127
        %v248 = vpop.permute.xlu0 %247
        %249 = vrot.lane.b32.xlu0 %v239, 127
        %v250 = vpop.permute.xlu0 %249
        %251 = vrot.lane.b32.xlu0 %v246, 127
        %v252 = vpop.permute.xlu0 %251
        %253 = vrot.lane.b32.xlu0 %v240, 127
        %v254 = vpop.permute.xlu0 %253
        %vm255 = vcmask 1039360
        %v256 = vsel %vm255, %v248, %v250
        %v257 = vsel %vm255, %v250, %v252
        %v258 = vsel %vm255, %v252, %v254
        %v262 = vcombine.high %v240, %v240
        %263 = vrot.lane.b32.xlu0 %v239, 126
        %v264 = vpop.permute.xlu0 %263
        %265 = vrot.lane.b32.xlu0 %v243, 126
        %v266 = vpop.permute.xlu0 %265
        %267 = vrot.lane.b32.xlu0 %v240, 126
        %v268 = vpop.permute.xlu0 %267
        %269 = vrot.lane.b32.xlu0 %v262, 126
        %v270 = vpop.permute.xlu0 %269
        %vm271 = vcmask 1031168
        %v272 = vsel %vm271, %v264, %v266
        %v273 = vsel %vm271, %v266, %v268
        %v274 = vsel %vm271, %v268, %v270
        %278 = vrot.lane.b32.xlu0 %v245, 104
        %v279 = vpop.permute.xlu0 %278
        %280 = vrot.lane.b32.xlu0 %v239, 104
        %v281 = vpop.permute.xlu0 %280
        %282 = vrot.lane.b32.xlu0 %v246, 104
        %v283 = vpop.permute.xlu0 %282
        %284 = vrot.lane.b32.xlu0 %v240, 104
        %v285 = vpop.permute.xlu0 %284
        %vm286 = vcmask 850944
        %v287 = vsel %vm286, %v279, %v281
        %v288 = vsel %vm286, %v281, %v283
        %v289 = vsel %vm286, %v283, %v285
        %293 = vrot.lane.b32.xlu0 %v239, 103
        %v294 = vpop.permute.xlu0 %293
        %295 = vrot.lane.b32.xlu0 %v243, 103
        %v296 = vpop.permute.xlu0 %295
        %297 = vrot.lane.b32.xlu0 %v240, 103
        %v298 = vpop.permute.xlu0 %297
        %299 = vrot.lane.b32.xlu0 %v262, 103
        %v300 = vpop.permute.xlu0 %299
        %vm301 = vcmask 842752
        %v302 = vsel %vm301, %v294, %v296
        %v303 = vsel %vm301, %v296, %v298
        %v304 = vsel %vm301, %v298, %v300
        %308 = vrot.lane.b32.xlu0 %v245, 102
        %v309 = vpop.permute.xlu0 %308
        %310 = vrot.lane.b32.xlu0 %v239, 102
        %v311 = vpop.permute.xlu0 %310
        %312 = vrot.lane.b32.xlu0 %v246, 102
        %v313 = vpop.permute.xlu0 %312
        %314 = vrot.lane.b32.xlu0 %v240, 102
        %v315 = vpop.permute.xlu0 %314
        %vm316 = vcmask 834560
        %v317 = vsel %vm316, %v309, %v311
        %v318 = vsel %vm316, %v311, %v313
        %v319 = vsel %vm316, %v313, %v315
        %323 = vrot.lane.b32.xlu0 %v239, 80
        %v324 = vpop.permute.xlu0 %323
        %325 = vrot.lane.b32.xlu0 %v243, 80
        %v326 = vpop.permute.xlu0 %325
        %327 = vrot.lane.b32.xlu0 %v240, 80
        %v328 = vpop.permute.xlu0 %327
        %329 = vrot.lane.b32.xlu0 %v262, 80
        %v330 = vpop.permute.xlu0 %329
        %vm331 = vcmask 654336
        %v332 = vsel %vm331, %v324, %v326
        %v333 = vsel %vm331, %v326, %v328
        %v334 = vsel %vm331, %v328, %v330
        %338 = vrot.lane.b32.xlu0 %v245, 79
        %v339 = vpop.permute.xlu0 %338
        %340 = vrot.lane.b32.xlu0 %v239, 79
        %v341 = vpop.permute.xlu0 %340
        %342 = vrot.lane.b32.xlu0 %v246, 79
        %v343 = vpop.permute.xlu0 %342
        %344 = vrot.lane.b32.xlu0 %v240, 79
        %v345 = vpop.permute.xlu0 %344
        %vm346 = vcmask 646144
        %v347 = vsel %vm346, %v339, %v341
        %v348 = vsel %vm346, %v341, %v343
        %v349 = vsel %vm346, %v343, %v345
        %353 = vrot.lane.b32.xlu0 %v239, 78
        %v354 = vpop.permute.xlu0 %353
        %355 = vrot.lane.b32.xlu0 %v243, 78
        %v356 = vpop.permute.xlu0 %355
        %357 = vrot.lane.b32.xlu0 %v240, 78
        %v358 = vpop.permute.xlu0 %357
        %359 = vrot.lane.b32.xlu0 %v262, 78
        %v360 = vpop.permute.xlu0 %359
        %vm361 = vcmask 637952
        %v362 = vsel %vm361, %v354, %v356
        %v363 = vsel %vm361, %v356, %v358
        %v364 = vsel %vm361, %v358, %v360
        %vm365 = vcmask 1043456
        %v366 = vsel %vm365, %v239, %v256
        %v367 = vsel %vm365, %v243, %v257
        %v368 = vsel %vm365, %v240, %v258
        %v369 = vsel %vm365, %v272, %v287
        %v370 = vsel %vm365, %v273, %v288
        %v371 = vsel %vm365, %v274, %v289
        %v372 = vsel %vm365, %v302, %v317
        %v373 = vsel %vm365, %v303, %v318
        %v374 = vsel %vm365, %v304, %v319
        %v375 = vsel %vm365, %v332, %v347
        %v376 = vsel %vm365, %v333, %v348
        %v377 = vsel %vm365, %v334, %v349
        %v378 = vld [vmem:[#allocation2] sm:$0xff]
        %v379 = vld [vmem:[#allocation2 + $0x8] sm:$0xff]
        %v380 = vld [vmem:[%s2] sm:$0xff]
        %v381 = vld [vmem:[%s2 + $0x8] sm:$0xff]
        %383 = vset.pattern.permute.xlu0 0
        %384 = vperm.xlu0 %383, %v380
        %v385 = vpop.permute.xlu0 %384
        %388 = vset.pattern.permute.xlu0 0
        %389 = vperm.xlu0 %388, %v381
        %v390 = vpop.permute.xlu0 %389
        %vm392 = vcmask 293888
        %v394 = vsel %vm392, %v378, 0
        %v397 = vsel %vm392, %v379, 0
        %v399 = vsel %vm365, %v362, 0
        %v401 = vsel %vm365, %v363, 0
        %v403 = vsel %vm365, %v364, 0
        %405 = vmatprep.subr.mxu0 0.0
        %406 = vmatpush1.msra.mxu0 0.0
        %407 = vmatprep.subr.mxu0 0.0
        %408 = vmatpush1.msra.mxu0 0.0
        %409 = vmatprep.subr.mxu0 0.0
        %410 = vmatpush1.msra.mxu0 0.0
        %411 = vmatprep.subr.mxu0 0.0
        %412 = vmatpush1.msra.mxu0 0.0
        %413 = vmatprep.subr.mxu0 0.0
        %414 = vmatpush1.msra.mxu0 0.0
        %415 = vmatprep.subr.mxu0 0.0
        %416 = vmatpush1.msra.mxu0 0.0
        %417 = vmatprep.subr.mxu0 0.0
        %418 = vmatpush1.msra.mxu0 0.0
        %419 = vmatprep.subr.mxu0 0.0
        %420 = vmatpush1.msra.mxu0 0.0
        %421 = vmatprep.subr.mxu0 0.0
        %422 = vmatpush1.msra.mxu0 0.0
        %423 = vmatprep.subr.mxu0 0.0
        %424 = vmatpush1.msra.mxu0 0.0
        %425 = vmatprep.subr.mxu0 0.0
        %426 = vmatpush1.msra.mxu0 0.0
        %427 = vmatprep.subr.mxu0 %v401
        %428 = vmatpush1.msra.mxu0 %v399
        %429 = vmatprep.subr.mxu0 %v376
        %430 = vmatpush1.msra.mxu0 %v375
        %431 = vmatprep.subr.mxu0 %v373
        %432 = vmatpush1.msra.mxu0 %v372
        %433 = vmatprep.subr.mxu0 %v370
        %434 = vmatpush1.msra.mxu0 %v369
        %435 = vmatprep.subr.mxu0 %v367
        %436 = vmatpush1.msra.mxu0 %v366
        %437 = vmatprep.subr.mxu0 0.0
        %438 = vmatpush2.msra.mxu0 0.0
        %439 = vmatprep.subr.mxu0 0.0
        %440 = vmatpush2.msra.mxu0 0.0
        %441 = vmatprep.subr.mxu0 0.0
        %442 = vmatpush2.msra.mxu0 0.0
        %443 = vmatprep.subr.mxu0 0.0
        %444 = vmatpush2.msra.mxu0 0.0
        %445 = vmatprep.subr.mxu0 0.0
        %446 = vmatpush2.msra.mxu0 0.0
        %447 = vmatprep.subr.mxu0 0.0
        %448 = vmatpush2.msra.mxu0 0.0
        %449 = vmatprep.subr.mxu0 0.0
        %450 = vmatpush2.msra.mxu0 0.0
        %451 = vmatprep.subr.mxu0 0.0
        %452 = vmatpush2.msra.mxu0 0.0
        %453 = vmatprep.subr.mxu0 0.0
        %454 = vmatpush2.msra.mxu0 0.0
        %455 = vmatprep.subr.mxu0 0.0
        %456 = vmatpush2.msra.mxu0 0.0
        %457 = vmatprep.subr.mxu0 0.0
        %458 = vmatpush2.msra.mxu0 0.0
        %459 = vmatprep.subr.mxu0 0.0
        %460 = vmatpush2.msra.mxu0 0.0
        %461 = vmatprep.subr.mxu0 0.0
        %462 = vmatpush2.msra.mxu0 0.0
        %463 = vmatprep.subr.mxu0 0.0
        %464 = vmatpush2.msra.mxu0 0.0
        %465 = vmatprep.subr.mxu0 0.0
        %466 = vmatpush2.msra.mxu0 0.0
        %467 = vmatprep.subr.mxu0 0.0
        %468 = vmatpush2.msra.mxu0 0.0
        %469 = vmatprep.mubr.f32.mxu0 0.0
        %470 = vmatmul.mubr.f32.gmra.mxu0 %v394
        %v471 = vpop.f32.mrf.mxu0
        %v472 = vadd.f32 %v385, %v471
        %v473 = vpop.f32.mrf.mxu0
        %v474 = vadd.f32 %v385, %v473
        %475 = vmatprep.mubr.f32.mxu0 0.0
        %476 = vmatmul.mubr.f32.gmra.mxu0 %v397
        %v477 = vpop.f32.mrf.mxu0
        %v478 = vadd.f32 %v390, %v477
        %v479 = vpop.f32.mrf.mxu0
        %v480 = vadd.f32 %v390, %v479
        %481 = vdwg.mxu0
        %482 = vmatprep.subr.mxu0 0.0
        %483 = vmatpush1.msra.mxu0 0.0
        %484 = vmatprep.subr.mxu0 0.0
        %485 = vmatpush1.msra.mxu0 0.0
        %486 = vmatprep.subr.mxu0 0.0
        %487 = vmatpush1.msra.mxu0 0.0
        %488 = vmatprep.subr.mxu0 0.0
        %489 = vmatpush1.msra.mxu0 0.0
        %490 = vmatprep.subr.mxu0 0.0
        %491 = vmatpush1.msra.mxu0 0.0
        %492 = vmatprep.subr.mxu0 0.0
        %493 = vmatpush1.msra.mxu0 0.0
        %494 = vmatprep.subr.mxu0 0.0
        %495 = vmatpush1.msra.mxu0 0.0
        %496 = vmatprep.subr.mxu0 0.0
        %497 = vmatpush1.msra.mxu0 0.0
        %498 = vmatprep.subr.mxu0 0.0
        %499 = vmatpush1.msra.mxu0 0.0
        %500 = vmatprep.subr.mxu0 0.0
        %501 = vmatpush1.msra.mxu0 0.0
        %502 = vmatprep.subr.mxu0 0.0
        %503 = vmatpush1.msra.mxu0 0.0
        %504 = vmatprep.subr.mxu0 0.0
        %505 = vmatpush1.msra.mxu0 %v403
        %506 = vmatprep.subr.mxu0 0.0
        %507 = vmatpush1.msra.mxu0 %v377
        %508 = vmatprep.subr.mxu0 0.0
        %509 = vmatpush1.msra.mxu0 %v374
        %510 = vmatprep.subr.mxu0 0.0
        %511 = vmatpush1.msra.mxu0 %v371
        %512 = vmatprep.subr.mxu0 0.0
        %513 = vmatpush1.msra.mxu0 %v368
        %514 = vmatprep.subr.mxu0 0.0
        %515 = vmatpush2.msra.mxu0 0.0
        %516 = vmatprep.subr.mxu0 0.0
        %517 = vmatpush2.msra.mxu0 0.0
        %518 = vmatprep.subr.mxu0 0.0
        %519 = vmatpush2.msra.mxu0 0.0
        %520 = vmatprep.subr.mxu0 0.0
        %521 = vmatpush2.msra.mxu0 0.0
        %522 = vmatprep.subr.mxu0 0.0
        %523 = vmatpush2.msra.mxu0 0.0
        %524 = vmatprep.subr.mxu0 0.0
        %525 = vmatpush2.msra.mxu0 0.0
        %526 = vmatprep.subr.mxu0 0.0
        %527 = vmatpush2.msra.mxu0 0.0
        %528 = vmatprep.subr.mxu0 0.0
        %529 = vmatpush2.msra.mxu0 0.0
        %530 = vmatprep.subr.mxu0 0.0
        %531 = vmatpush2.msra.mxu0 0.0
        %532 = vmatprep.subr.mxu0 0.0
        %533 = vmatpush2.msra.mxu0 0.0
        %534 = vmatprep.subr.mxu0 0.0
        %535 = vmatpush2.msra.mxu0 0.0
        %536 = vmatprep.subr.mxu0 0.0
        %537 = vmatpush2.msra.mxu0 0.0
        %538 = vmatprep.subr.mxu0 0.0
        %539 = vmatpush2.msra.mxu0 0.0
        %540 = vmatprep.subr.mxu0 0.0
        %541 = vmatpush2.msra.mxu0 0.0
        %542 = vmatprep.subr.mxu0 0.0
        %543 = vmatpush2.msra.mxu0 0.0
        %544 = vmatprep.subr.mxu0 0.0
        %545 = vmatpush2.msra.mxu0 0.0
        %546 = vmatprep.mubr.f32.mxu0 0.0
        %547 = vmatmul.mubr.f32.gmra.mxu0 %v394
        %v548 = vpop.f32.mrf.mxu0
        %v549 = vadd.f32 %v385, %v548
        %v550 = vpop.f32.mrf.mxu0
        %551 = vmatprep.mubr.f32.mxu0 0.0
        %552 = vmatmul.mubr.f32.gmra.mxu0 %v397
        %v553 = vpop.f32.mrf.mxu0
        %v554 = vadd.f32 %v390, %v553
        %v555 = vpop.f32.mrf.mxu0
        %556 = vdwg.mxu0
        %v557 = vmax.f32 %v472, 0.0
        %v558 = vmax.f32 %v474, 0.0
        %v559 = vmax.f32 %v549, 0.0
        %v560 = vmax.f32 %v478, 0.0
        %v561 = vmax.f32 %v480, 0.0
        %v562 = vmax.f32 %v554, 0.0
        %v563 = vld [vmem:[%s3] sm:$0xf]
        %v564 = vld [vmem:[%s4] sm:$0xf]
        %566 = vset.pattern.permute.xlu0 0
        %567 = vperm.xlu0 %566, %v564
        %v568 = vpop.permute.xlu0 %567
        %vm570 = vcmask 130048
        %v572 = vsel %vm570, %v563, 0
        %574 = vmatprep.subr.mxu0 0.0
        %575 = vmatpush1.msra.mxu0 0.0
        %576 = vmatprep.subr.mxu0 0.0
        %577 = vmatpush1.msra.mxu0 0.0
        %578 = vmatprep.subr.mxu0 0.0
        %579 = vmatpush1.msra.mxu0 0.0
        %580 = vmatprep.subr.mxu0 0.0
        %581 = vmatpush1.msra.mxu0 0.0
        %582 = vmatprep.subr.mxu0 0.0
        %583 = vmatpush1.msra.mxu0 0.0
        %584 = vmatprep.subr.mxu0 0.0
        %585 = vmatpush1.msra.mxu0 0.0
        %586 = vmatprep.subr.mxu0 0.0
        %587 = vmatpush1.msra.mxu0 0.0
        %588 = vmatprep.subr.mxu0 0.0
        %589 = vmatpush1.msra.mxu0 0.0
        %590 = vmatprep.subr.mxu0 0.0
        %591 = vmatpush1.msra.mxu0 0.0
        %592 = vmatprep.subr.mxu0 0.0
        %593 = vmatpush1.msra.mxu0 0.0
        %594 = vmatprep.subr.mxu0 0.0
        %595 = vmatpush1.msra.mxu0 0.0
        %596 = vmatprep.subr.mxu0 0.0
        %597 = vmatpush1.msra.mxu0 0.0
        %598 = vmatprep.subr.mxu0 0.0
        %599 = vmatpush1.msra.mxu0 0.0
        %600 = vmatprep.subr.mxu0 0.0
        %601 = vmatpush1.msra.mxu0 0.0
        %602 = vmatprep.subr.mxu0 %v561
        %603 = vmatpush1.msra.mxu0 %v560
        %604 = vmatprep.subr.mxu0 %v558
        %605 = vmatpush1.msra.mxu0 %v557
        %606 = vmatprep.subr.mxu0 0.0
        %607 = vmatpush2.msra.mxu0 0.0
        %608 = vmatprep.subr.mxu0 0.0
        %609 = vmatpush2.msra.mxu0 0.0
        %610 = vmatprep.subr.mxu0 0.0
        %611 = vmatpush2.msra.mxu0 0.0
        %612 = vmatprep.subr.mxu0 0.0
        %613 = vmatpush2.msra.mxu0 0.0
        %614 = vmatprep.subr.mxu0 0.0
        %615 = vmatpush2.msra.mxu0 0.0
        %616 = vmatprep.subr.mxu0 0.0
        %617 = vmatpush2.msra.mxu0 0.0
        %618 = vmatprep.subr.mxu0 0.0
        %619 = vmatpush2.msra.mxu0 0.0
        %620 = vmatprep.subr.mxu0 0.0
        %621 = vmatpush2.msra.mxu0 0.0
        %622 = vmatprep.subr.mxu0 0.0
        %623 = vmatpush2.msra.mxu0 0.0
        %624 = vmatprep.subr.mxu0 0.0
        %625 = vmatpush2.msra.mxu0 0.0
        %626 = vmatprep.subr.mxu0 0.0
        %627 = vmatpush2.msra.mxu0 0.0
        %628 = vmatprep.subr.mxu0 0.0
        %629 = vmatpush2.msra.mxu0 0.0
        %630 = vmatprep.subr.mxu0 0.0
        %631 = vmatpush2.msra.mxu0 0.0
        %632 = vmatprep.subr.mxu0 0.0
        %633 = vmatpush2.msra.mxu0 0.0
        %634 = vmatprep.subr.mxu0 0.0
        %635 = vmatpush2.msra.mxu0 0.0
        %636 = vmatprep.subr.mxu0 0.0
        %637 = vmatpush2.msra.mxu0 0.0
        %638 = vmatprep.mubr.f32.mxu0 0.0
        %639 = vmatmul.mubr.f32.gmra.mxu0 %v572
        %v640 = vpop.f32.mrf.mxu0
        %v641 = vadd.f32 %v568, %v640
        %v642 = vpop.f32.mrf.mxu0
        %v643 = vadd.f32 %v568, %v642
        %644 = vdwg.mxu0
        %645 = vmatprep.subr.mxu0 0.0
        %646 = vmatpush1.msra.mxu0 0.0
        %647 = vmatprep.subr.mxu0 0.0
        %648 = vmatpush1.msra.mxu0 0.0
        %649 = vmatprep.subr.mxu0 0.0
        %650 = vmatpush1.msra.mxu0 0.0
        %651 = vmatprep.subr.mxu0 0.0
        %652 = vmatpush1.msra.mxu0 0.0
        %653 = vmatprep.subr.mxu0 0.0
        %654 = vmatpush1.msra.mxu0 0.0
        %655 = vmatprep.subr.mxu0 0.0
        %656 = vmatpush1.msra.mxu0 0.0
        %657 = vmatprep.subr.mxu0 0.0
        %658 = vmatpush1.msra.mxu0 0.0
        %659 = vmatprep.subr.mxu0 0.0
        %660 = vmatpush1.msra.mxu0 0.0
        %661 = vmatprep.subr.mxu0 0.0
        %662 = vmatpush1.msra.mxu0 0.0
        %663 = vmatprep.subr.mxu0 0.0
        %664 = vmatpush1.msra.mxu0 0.0
        %665 = vmatprep.subr.mxu0 0.0
        %666 = vmatpush1.msra.mxu0 0.0
        %667 = vmatprep.subr.mxu0 0.0
        %668 = vmatpush1.msra.mxu0 0.0
        %669 = vmatprep.subr.mxu0 0.0
        %670 = vmatpush1.msra.mxu0 0.0
        %671 = vmatprep.subr.mxu0 0.0
        %672 = vmatpush1.msra.mxu0 0.0
        %673 = vmatprep.subr.mxu0 0.0
        %674 = vmatpush1.msra.mxu0 %v562
        %675 = vmatprep.subr.mxu0 0.0
        %676 = vmatpush1.msra.mxu0 %v559
        %677 = vmatprep.subr.mxu0 0.0
        %678 = vmatpush2.msra.mxu0 0.0
        %679 = vmatprep.subr.mxu0 0.0
        %680 = vmatpush2.msra.mxu0 0.0
        %681 = vmatprep.subr.mxu0 0.0
        %682 = vmatpush2.msra.mxu0 0.0
        %683 = vmatprep.subr.mxu0 0.0
        %684 = vmatpush2.msra.mxu0 0.0
        %685 = vmatprep.subr.mxu0 0.0
        %686 = vmatpush2.msra.mxu0 0.0
        %687 = vmatprep.subr.mxu0 0.0
        %688 = vmatpush2.msra.mxu0 0.0
        %689 = vmatprep.subr.mxu0 0.0
        %690 = vmatpush2.msra.mxu0 0.0
        %691 = vmatprep.subr.mxu0 0.0
        %692 = vmatpush2.msra.mxu0 0.0
        %693 = vmatprep.subr.mxu0 0.0
        %694 = vmatpush2.msra.mxu0 0.0
        %695 = vmatprep.subr.mxu0 0.0
        %696 = vmatpush2.msra.mxu0 0.0
        %697 = vmatprep.subr.mxu0 0.0
        %698 = vmatpush2.msra.mxu0 0.0
        %699 = vmatprep.subr.mxu0 0.0
        %700 = vmatpush2.msra.mxu0 0.0
        %701 = vmatprep.subr.mxu0 0.0
        %702 = vmatpush2.msra.mxu0 0.0
        %703 = vmatprep.subr.mxu0 0.0
        %704 = vmatpush2.msra.mxu0 0.0
        %705 = vmatprep.subr.mxu0 0.0
        %706 = vmatpush2.msra.mxu0 0.0
        %707 = vmatprep.subr.mxu0 0.0
        %708 = vmatpush2.msra.mxu0 0.0
        %709 = vmatprep.mubr.f32.mxu0 0.0
        %710 = vmatmul.mubr.f32.gmra.mxu0 %v572
        %v711 = vpop.f32.mrf.mxu0
        %v712 = vadd.f32 %v568, %v711
        %v713 = vpop.f32.mrf.mxu0
        %714 = vdwg.mxu0
        %v715 = vmax.f32 %v641, 0.0
        %v716 = vmax.f32 %v643, 0.0
        %v717 = vmax.f32 %v712, 0.0
        %v720 = vcombine.low %v715, %v716
        %722 = vst [vmem:[%s232] sm:$0xff] %v720
        %723 = vst [vmem:[%s232 + $0x8] sm:$0xf] %v717
        %s724 = sand.u32 %s138, 1
        %s725 = scalar_lea.sflag [#allocation4], %s724
        %s726 = sand.u32 %s138, 1
        %s727 = smul.addr %s726, 12
        %s728 = scalar_lea.vmem [#allocation5], %s727
        // Predicated region
        $region45: #{tpu_custom_call.1} parent=39 // pred_check
          %p729 = pneg %p148
        $region46: #{tpu_custom_call.1} parent=39 // pred_check_branch
          %731 = sbr.rel (%p729) target = $region48
        $region47: #{tpu_custom_call.1} parent=39 // pred_region
          %s733 = ssub.s32 192, 192
          %734 = vsyncadd %s725, %s733
          %s735 = smul.addr %s20, 3
          %s736 = smul.addr %s735, 64
          %s737 = scalar_lea.hbm %s5, %s736
          %s739 = sshll.u32 %s728, 4
          %s740 = int_to_ptr.vmem [resolvable:$true] %s739
          %742 = dma.vmem_to_hbm [thread:$0]  %s740, 192, %s737, %s725
        $region48: #{tpu_custom_call.1} parent=39 // pred_fallthru
          _
      $region40: #{tpu_custom_call.1} parent=5 // pred_fallthru
        _
      %p743 = scmp.le.s32.totalorder 2, %s15
      // Predicated region
      $region49: #{tpu_custom_call.1} parent=5 // pred_check
        %p744 = pneg %p743
      $region50: #{tpu_custom_call.1} parent=5 // pred_check_branch
        %746 = sbr.rel (%p744) target = $region52
      $region51: #{tpu_custom_call.1} parent=5 // pred_region
        %s747 = ssub.s32 %s15, 2
        // Predicated region
        $region53: #{tpu_custom_call.1} parent=51 // pred_check
          %p748 = pneg %p154
        $region54: #{tpu_custom_call.1} parent=51 // pred_check_branch
          %750 = sbr.rel (%p748) target = $region56
        $region55: #{tpu_custom_call.1} parent=51 // pred_region
          %s751 = sand.u32 %s139, 1
          %s752 = scalar_lea.sflag [#allocation4], %s751
          %s753 = sand.u32 %s139, 1
          %s754 = smul.addr %s753, 12
          %s755 = scalar_lea.vmem [#allocation5], %s754
          %756 = dma.done %s752, 192
        $region56: #{tpu_custom_call.1} parent=51 // pred_fallthru
          _
      $region52: #{tpu_custom_call.1} parent=5 // pred_fallthru
        _
    $region6: #{tpu_custom_call.1} parent=1 // loop_footer
      %s19 = sadd.s32 1, %s15
    $region7: #{tpu_custom_call.1} parent=1 // loop_footer_branch
      %14 = sbr.rel target = $region3
    $region8: #{tpu_custom_call.1} parent=1 // loop_exit
      _
    %757 = vsyncpa [#allocation3], 1
    %s758 = scalar_lea.sflag [#allocation3], 1
    %759 = vsyncpa %s758, 1
    %760 = vsyncpa [#allocation4], 1
    %s761 = scalar_lea.sflag [#allocation4], 1
    %762 = vsyncpa %s761, 1

</llo_original>
